<compile_context>
chip_gen: v7x
topology: tpu7x:2x2x1
jax: 0.10.0
libtpu: 0.0.40
codegen_flags: <defaults>
</compile_context>

<pallas_src>
import functools

import jax
import jax.numpy as jnp
from jax.experimental import pallas as pl
from jax.experimental.pallas import tpu as pltpu


def _fused_mlp_kernel(*refs, sigmoid_flags):
    """One grid step: h = x_tile; for each layer: h = (h @ W + b) [sigmoid]."""
    x_ref = refs[0]
    o_ref = refs[-1]
    param_refs = refs[1:-1]  # interleaved (w0, b0, w1, b1, ...)

    h = x_ref[...].astype(jnp.float32)
    for li, apply_sigmoid in enumerate(sigmoid_flags):
        w = param_refs[2 * li][...]
        b = param_refs[2 * li + 1][...]  # (1, out_dim) -> broadcasts over rows
        h = jnp.dot(h, w, preferred_element_type=jnp.float32) + b
        if apply_sigmoid:
            h = jax.nn.sigmoid(h)  # EUP exp + VPU, fused in-kernel, f32
    o_ref[...] = h.astype(o_ref.dtype)


def _pick_batch_tile(batch):
    """Largest batch tile (multiple of 8, <=512) that evenly divides `batch`.

    Falls back to the full batch (single block) for tiny / odd batches, which
    is legal because a block dim equal to the full array dim is always allowed.
    """
    if batch % 8 != 0:
        return batch
    for tm in (512, 256, 128, 64, 32, 16, 8):
        if batch % tm == 0:
            return tm
    return batch


def mlp_forward_pallas(x, params, sigmoid_flags):
    """Run the whole MLP in a single fused Pallas kernel.

    params: list of (W:(in,out) f32, b:(1,out) f32) per layer.
    sigmoid_flags: tuple of bools, one per layer.
    """
    B, K = x.shape
    N_out = params[-1][0].shape[1]
    tm = _pick_batch_tile(B)
    grid = (B // tm,)

    vmem = pltpu.MemorySpace.VMEM

    in_specs = [pl.BlockSpec((tm, K), lambda i: (i, 0), memory_space=vmem)]
    flat_params = []
    for w, b in params:
        in_specs.append(
            pl.BlockSpec(w.shape, lambda i: (0, 0), memory_space=vmem))
        in_specs.append(
            pl.BlockSpec(b.shape, lambda i: (0, 0), memory_space=vmem))
        flat_params.extend((w, b))

    out_specs = pl.BlockSpec((tm, N_out), lambda i: (i, 0), memory_space=vmem)

    # Advisory cost hint for XLA's scheduler.
    flops = 0
    transcendentals = 0
    bytes_accessed = x.size * x.dtype.itemsize + B * N_out * 4
    for (w, b), sig in zip(params, sigmoid_flags):
        k_in, n_out = w.shape
        flops += 2 * B * k_in * n_out
        if sig:
            transcendentals += B * n_out
        bytes_accessed += (w.size + b.size) * 4
    cost = pl.CostEstimate(flops=flops, transcendentals=transcendentals,
                           bytes_accessed=bytes_accessed)

    kernel = functools.partial(_fused_mlp_kernel,
                               sigmoid_flags=tuple(sigmoid_flags))

    return pl.pallas_call(
        kernel,
        out_shape=jax.ShapeDtypeStruct((B, N_out), jnp.float32),
        grid=grid,
        in_specs=in_specs,
        out_specs=out_specs,
        compiler_params=pltpu.CompilerParams(
            dimension_semantics=("parallel",)),
        cost_estimate=cost,
    )(x, *flat_params)


class MultiLayerPerceptron:
    """JAX/Pallas port of the PyTorch MultiLayerPerceptron.

    Layers: [Linear -> Sigmoid] * len(embed_dims), then optional output Linear.
    The whole forward pass is fused into a single Pallas kernel.
    Note: `dropout` is accepted for signature parity but the reference module
    never adds a Dropout layer, so it is a no-op here as well.
    """

    def __init__(self, input_dim, embed_dims, dropout, output_layer=True,
                 output_dim=1, key=jax.random.PRNGKey(0)):
        del dropout  # unused in the reference forward pass
        self.params = []          # list of (W:(in,out), b:(1,out))
        self.sigmoid_flags = []   # per-layer activation flag
        in_dim = input_dim
        dims = list(embed_dims) + ([output_dim] if output_layer else [])
        sigmoids = [True] * len(embed_dims) + ([False] if output_layer else [])
        for out_dim, apply_sigmoid in zip(dims, sigmoids):
            key, kw, kb = jax.random.split(key, 3)
            # Mirrors torch.nn.Linear default init: U(-1/sqrt(in), 1/sqrt(in))
            bound = 1.0 / (in_dim ** 0.5)
            w = jax.random.uniform(kw, (in_dim, out_dim), jnp.float32,
                                   -bound, bound)
            b = jax.random.uniform(kb, (1, out_dim), jnp.float32,
                                   -bound, bound)
            self.params.append((w, b))
            self.sigmoid_flags.append(apply_sigmoid)
            in_dim = out_dim
        self.sigmoid_flags = tuple(self.sigmoid_flags)

    def __call__(self, x):
        x = x.astype(jnp.float32)  # matches `x.float()` in the reference
        return mlp_forward_pallas(x, self.params, self.sigmoid_flags)


def _reference_forward(mlp, x):
    """Plain-JAX reference for a sanity check."""
    x = x.astype(jnp.float32)
    for (w, b), apply_sigmoid in zip(mlp.params, mlp.sigmoid_flags):
        x = x @ w + b
        if apply_sigmoid:
            x = jax.nn.sigmoid(x)
    return x


if __name__ == "__main__":
    key = jax.random.PRNGKey(0)
    input_dim = 16
    embed_dims = (32, 32)

    mlp = MultiLayerPerceptron(input_dim, embed_dims, dropout=0.2,
                               output_layer=True, output_dim=1,
                               key=jax.random.PRNGKey(1))

    # Small-batch case (single block, grid=(1,)).
    batch = 2
    x = jax.random.normal(key, (batch, input_dim), dtype=jnp.float32)
    out = jax.block_until_ready(mlp(x))
    ref = _reference_forward(mlp, x)
    assert out.shape == (batch, 1), out.shape
    assert jnp.allclose(out, ref, atol=1e-5, rtol=1e-5), (out, ref)

    # Larger-batch case exercising the batch grid (grid=(2,), tm=256).
    key2 = jax.random.PRNGKey(2)
    batch_big = 512
    x_big = jax.random.normal(key2, (batch_big, input_dim), dtype=jnp.float32)
    out_big = jax.block_until_ready(mlp(x_big))
    ref_big = _reference_forward(mlp, x_big)
    assert out_big.shape == (batch_big, 1), out_big.shape
    assert jnp.allclose(out_big, ref_big, atol=1e-5, rtol=1e-5)

    print("KERNEL_OK")
</pallas_src>

<mosaic_0001>
module attributes {stable_mosaic.version = 11 : i64} {
  func.func @_fused_mlp_kernel(%arg0: i32, %arg1: memref<2x16xf32, #tpu.memory_space<vmem>>, %arg2: memref<16x32xf32, #tpu.memory_space<vmem>>, %arg3: memref<1x32xf32, #tpu.memory_space<vmem>>, %arg4: memref<32x32xf32, #tpu.memory_space<vmem>>, %arg5: memref<1x32xf32, #tpu.memory_space<vmem>>, %arg6: memref<32x1xf32, #tpu.memory_space<vmem>>, %arg7: memref<1x1xf32, #tpu.memory_space<vmem>>, %arg8: memref<2x1xf32, #tpu.memory_space<vmem>>) attributes {dimension_semantics = [#tpu.dimension_semantics<parallel>], iteration_bounds = array<i64: 1>, scalar_prefetch = 0 : i64, scratch_operands = 0 : i64, tpu.core_type = #tpu.core_type<tc>, window_params = [{transform_indices = @transform_0, window_bounds = array<i64: 2, 16>}, {pipeline_mode = #tpu.pipeline_mode<synchronous>, transform_indices = @transform_1, window_bounds = array<i64: 16, 32>}, {pipeline_mode = #tpu.pipeline_mode<synchronous>, transform_indices = @transform_2, window_bounds = array<i64: 1, 32>}, {pipeline_mode = #tpu.pipeline_mode<synchronous>, transform_indices = @transform_3, window_bounds = array<i64: 32, 32>}, {pipeline_mode = #tpu.pipeline_mode<synchronous>, transform_indices = @transform_4, window_bounds = array<i64: 1, 32>}, {pipeline_mode = #tpu.pipeline_mode<synchronous>, transform_indices = @transform_5, window_bounds = array<i64: 32, 1>}, {pipeline_mode = #tpu.pipeline_mode<synchronous>, transform_indices = @transform_6, window_bounds = array<i64: 1, 1>}, {transform_indices = @transform_7, window_bounds = array<i64: 2, 1>}]} {
    %c0 = arith.constant 0 : index
    %c0_0 = arith.constant 0 : index
    %0 = vector.load %arg1[%c0, %c0_0] : memref<2x16xf32, #tpu.memory_space<vmem>>, vector<2x16xf32>
    %c0_1 = arith.constant 0 : index
    %c0_2 = arith.constant 0 : index
    %1 = vector.load %arg2[%c0_1, %c0_2] : memref<16x32xf32, #tpu.memory_space<vmem>>, vector<16x32xf32>
    %c0_3 = arith.constant 0 : index
    %c0_4 = arith.constant 0 : index
    %2 = vector.load %arg3[%c0_3, %c0_4] : memref<1x32xf32, #tpu.memory_space<vmem>>, vector<1x32xf32>
    %cst = arith.constant dense<0.000000e+00> : vector<2x32xf32>
    %3 = tpu.matmul %0, %1, %cst {dimension_numbers = #tpu.dot_dimension_numbers<[1], [0], [0], [1], [0, 0, 1, 1], [], []>} : vector<2x16xf32>, vector<16x32xf32>, vector<2x32xf32> -> vector<2x32xf32>
    %4 = vector.broadcast %2 : vector<1x32xf32> to vector<2x32xf32>
    %5 = arith.addf %3, %4 : vector<2x32xf32>
    %6 = arith.negf %5 : vector<2x32xf32>
    %7 = math.exp %6 : vector<2x32xf32>
    %cst_5 = arith.constant 1.000000e+00 : f32
    %8 = vector.broadcast %cst_5 : f32 to vector<2x32xf32>
    %9 = arith.addf %8, %7 : vector<2x32xf32>
    %10 = arith.divf %8, %9 : vector<2x32xf32>
    %c0_6 = arith.constant 0 : index
    %c0_7 = arith.constant 0 : index
    %11 = vector.load %arg4[%c0_6, %c0_7] : memref<32x32xf32, #tpu.memory_space<vmem>>, vector<32x32xf32>
    %c0_8 = arith.constant 0 : index
    %c0_9 = arith.constant 0 : index
    %12 = vector.load %arg5[%c0_8, %c0_9] : memref<1x32xf32, #tpu.memory_space<vmem>>, vector<1x32xf32>
    %cst_10 = arith.constant dense<0.000000e+00> : vector<2x32xf32>
    %13 = tpu.matmul %10, %11, %cst_10 {dimension_numbers = #tpu.dot_dimension_numbers<[1], [0], [0], [1], [0, 0, 1, 1], [], []>} : vector<2x32xf32>, vector<32x32xf32>, vector<2x32xf32> -> vector<2x32xf32>
    %14 = vector.broadcast %12 : vector<1x32xf32> to vector<2x32xf32>
    %15 = arith.addf %13, %14 : vector<2x32xf32>
    %16 = arith.negf %15 : vector<2x32xf32>
    %17 = math.exp %16 : vector<2x32xf32>
    %cst_11 = arith.constant 1.000000e+00 : f32
    %18 = vector.broadcast %cst_11 : f32 to vector<2x32xf32>
    %19 = arith.addf %18, %17 : vector<2x32xf32>
    %20 = arith.divf %18, %19 : vector<2x32xf32>
    %c0_12 = arith.constant 0 : index
    %c0_13 = arith.constant 0 : index
    %21 = vector.load %arg6[%c0_12, %c0_13] : memref<32x1xf32, #tpu.memory_space<vmem>>, vector<32x1xf32>
    %c0_14 = arith.constant 0 : index
    %c0_15 = arith.constant 0 : index
    %22 = vector.load %arg7[%c0_14, %c0_15] : memref<1x1xf32, #tpu.memory_space<vmem>>, vector<1x1xf32>
    %cst_16 = arith.constant dense<0.000000e+00> : vector<2x1xf32>
    %23 = tpu.matmul %20, %21, %cst_16 {dimension_numbers = #tpu.dot_dimension_numbers<[1], [0], [0], [1], [0, 0, 1, 1], [], []>} : vector<2x32xf32>, vector<32x1xf32>, vector<2x1xf32> -> vector<2x1xf32>
    %24 = vector.broadcast %22 : vector<1x1xf32> to vector<2x1xf32>
    %25 = arith.addf %23, %24 : vector<2x1xf32>
    %c0_17 = arith.constant 0 : index
    %c0_18 = arith.constant 0 : index
    %26 = vector.load %arg8[%c0_17, %c0_18] : memref<2x1xf32, #tpu.memory_space<vmem>>, vector<2x1xf32>
    tpu.vector_store %arg8[%c0_17, %c0_18], %25 {strides = array<i32>} : memref<2x1xf32, #tpu.memory_space<vmem>>, vector<2x1xf32>,
    return
  }
  func.func @transform_0(%arg0: i32) -> (i32, i32) {
    %c0_i32 = arith.constant 0 : i32
    %c0_i32_0 = arith.constant 0 : i32
    return %arg0, %c0_i32 : i32, i32
  }
  func.func @transform_1(%arg0: i32) -> (i32, i32) {
    %c0_i32 = arith.constant 0 : i32
    %c0_i32_0 = arith.constant 0 : i32
    %c0_i32_1 = arith.constant 0 : i32
    return %c0_i32, %c0_i32_0 : i32, i32
  }
  func.func @transform_2(%arg0: i32) -> (i32, i32) {
    %c0_i32 = arith.constant 0 : i32
    %c0_i32_0 = arith.constant 0 : i32
    %c0_i32_1 = arith.constant 0 : i32
    return %c0_i32, %c0_i32_0 : i32, i32
  }
  func.func @transform_3(%arg0: i32) -> (i32, i32) {
    %c0_i32 = arith.constant 0 : i32
    %c0_i32_0 = arith.constant 0 : i32
    %c0_i32_1 = arith.constant 0 : i32
    return %c0_i32, %c0_i32_0 : i32, i32
  }
  func.func @transform_4(%arg0: i32) -> (i32, i32) {
    %c0_i32 = arith.constant 0 : i32
    %c0_i32_0 = arith.constant 0 : i32
    %c0_i32_1 = arith.constant 0 : i32
    return %c0_i32, %c0_i32_0 : i32, i32
  }
  func.func @transform_5(%arg0: i32) -> (i32, i32) {
    %c0_i32 = arith.constant 0 : i32
    %c0_i32_0 = arith.constant 0 : i32
    %c0_i32_1 = arith.constant 0 : i32
    return %c0_i32, %c0_i32_0 : i32, i32
  }
  func.func @transform_6(%arg0: i32) -> (i32, i32) {
    %c0_i32 = arith.constant 0 : i32
    %c0_i32_0 = arith.constant 0 : i32
    %c0_i32_1 = arith.constant 0 : i32
    return %c0_i32, %c0_i32_0 : i32, i32
  }
  func.func @transform_7(%arg0: i32) -> (i32, i32) {
    %c0_i32 = arith.constant 0 : i32
    %c0_i32_0 = arith.constant 0 : i32
    return %arg0, %c0_i32 : i32, i32
  }
}

</mosaic_0001>

<llo_original>
// kernel: tpu_custom_call.1
$region0: #{tpu_custom_call.1}
  #allocation0 [shape = 'u32[]', space=smem, size = 0x4, offset = 0x4, fixed_abs, tag = 'smem constant byte address 0x4 - core index']
  #allocation1 [shape = 'u32[144,128]{1,0:T(1,128)}', space=vmem, size = 0x12000, scoped, tag = 'internal scratch']
  #allocation2 [shape = 'f32[1,1]{1,0:T(1,128)S(1)}', space=vmem, size = 0x200, scoped, tag = 'scoped memory for tpu_custom_call.1']
  %s0 = inlined_call_operand.hbm [shape: f32[2,16], index: 0, kind: input, shape index: {}]
  %s1 = inlined_call_operand.vmem [shape: f32[16,32], index: 1, kind: input, shape index: {}]
  %s2 = inlined_call_operand.hbm [shape: f32[1,32], index: 2, kind: input, shape index: {}]
  %s3 = inlined_call_operand.vmem [shape: f32[32,32], index: 3, kind: input, shape index: {}]
  %s4 = inlined_call_operand.vmem [shape: f32[1,32], index: 4, kind: input, shape index: {}]
  %s5 = inlined_call_operand.vmem [shape: f32[32,1], index: 5, kind: input, shape index: {}]
  %s6 = inlined_call_operand.<no memory space> [shape: f32[1,1], index: 6, kind: input, shape index: {}]
  %s7 = inlined_call_operand.vmem [shape: f32[2,1], index: 7, kind: output, shape index: {}]
  %s8 = sld [smem:[#allocation0]]
  $region46: #{tpu_custom_call.1} parent=0
    _
  %s10 = ssub.s32 1, %s8
  %s11 = scalar_select 0, %s10, %s8
  %v12 = vstv %s6
  %13 = vst [vmem:[#allocation2] sm:$0x1] %v12
  $region1: #{tpu_custom_call.1} parent=0
    #allocation3 [shape = 'u8[1024]{0}', space=vmem, size = 0x400, scoped, tag = 'input window, operand 0, single buffered']
    #allocation4 [shape = 's32[1]{0}', space=sflag, size = 0x4, scoped, tag = 'scoped memory for tpu_custom_call.1']
    #allocation5 [shape = 'u8[512]{0}', space=vmem, size = 0x400, scoped, tag = 'input window, operand 2, single buffered']
    #allocation6 [shape = 's32[1]{0}', space=sflag, size = 0x4, scoped, tag = 'scoped memory for tpu_custom_call.1']
    %14 = vsyncpa [#allocation4], 0
    %15 = vsyncpa [#allocation6], 0
    // Predicated region
    $region2: #{tpu_custom_call.1} parent=1 // pred_check
      _
    $region3: #{tpu_custom_call.1} parent=1 // pred_check_branch
      %17 = sbr.rel (0) target = $region5
    $region4: #{tpu_custom_call.1} parent=1 // pred_region
      %s19 = ssub.s32 32, 32
      %20 = vsyncadd [#allocation4], %s19
      %s22 = sshll.u32 [#allocation3], 4
      %s23 = int_to_ptr.vmem [resolvable:$true] %s22
      %25 = dma.hbm_to_vmem [thread:$0]  %s0, 32, %s23, [#allocation4]
    $region5: #{tpu_custom_call.1} parent=1 // pred_fallthru
      _
    // Predicated region
    $region6: #{tpu_custom_call.1} parent=1 // pred_check
      _
    $region7: #{tpu_custom_call.1} parent=1 // pred_check_branch
      %27 = sbr.rel (0) target = $region9
    $region8: #{tpu_custom_call.1} parent=1 // pred_region
      _
    $region9: #{tpu_custom_call.1} parent=1 // pred_fallthru
      _
    // Predicated region
    $region10: #{tpu_custom_call.1} parent=1 // pred_check
      _
    $region11: #{tpu_custom_call.1} parent=1 // pred_check_branch
      %29 = sbr.rel (0) target = $region13
    $region12: #{tpu_custom_call.1} parent=1 // pred_region
      %s31 = ssub.s32 16, 16
      %32 = vsyncadd [#allocation6], %s31
      %s34 = sshll.u32 [#allocation5], 4
      %s35 = int_to_ptr.vmem [resolvable:$true] %s34
      %37 = dma.hbm_to_vmem [thread:$0]  %s2, 16, %s35, [#allocation6]
    $region13: #{tpu_custom_call.1} parent=1 // pred_fallthru
      _
    // Predicated region
    $region14: #{tpu_custom_call.1} parent=1 // pred_check
      _
    $region15: #{tpu_custom_call.1} parent=1 // pred_check_branch
      %39 = sbr.rel (0) target = $region17
    $region16: #{tpu_custom_call.1} parent=1 // pred_region
      _
    $region17: #{tpu_custom_call.1} parent=1 // pred_fallthru
      _
    // Predicated region
    $region18: #{tpu_custom_call.1} parent=1 // pred_check
      _
    $region19: #{tpu_custom_call.1} parent=1 // pred_check_branch
      %41 = sbr.rel (0) target = $region21
    $region20: #{tpu_custom_call.1} parent=1 // pred_region
      _
    $region21: #{tpu_custom_call.1} parent=1 // pred_fallthru
      _
    // Predicated region
    $region22: #{tpu_custom_call.1} parent=1 // pred_check
      _
    $region23: #{tpu_custom_call.1} parent=1 // pred_check_branch
      %43 = sbr.rel (0) target = $region25
    $region24: #{tpu_custom_call.1} parent=1 // pred_region
      _
    $region25: #{tpu_custom_call.1} parent=1 // pred_fallthru
      _
    // Predicated region
    $region26: #{tpu_custom_call.1} parent=1 // pred_check
      _
    $region27: #{tpu_custom_call.1} parent=1 // pred_check_branch
      %45 = sbr.rel (0) target = $region29
    $region28: #{tpu_custom_call.1} parent=1 // pred_region
      _
    $region29: #{tpu_custom_call.1} parent=1 // pred_fallthru
      _
    // Predicated region
    $region30: #{tpu_custom_call.1} parent=1 // pred_check
      _
    $region31: #{tpu_custom_call.1} parent=1 // pred_check_branch
      %47 = sbr.rel (0) target = $region33
    $region32: #{tpu_custom_call.1} parent=1 // pred_region
      %48 = dma.done [#allocation4], 32
    $region33: #{tpu_custom_call.1} parent=1 // pred_fallthru
      _
    // Predicated region
    $region34: #{tpu_custom_call.1} parent=1 // pred_check
      _
    $region35: #{tpu_custom_call.1} parent=1 // pred_check_branch
      %50 = sbr.rel (0) target = $region37
    $region36: #{tpu_custom_call.1} parent=1 // pred_region
      %51 = dma.done [#allocation6], 16
    $region37: #{tpu_custom_call.1} parent=1 // pred_fallthru
      _
    %v52 = vld [vmem:[#allocation3] sm:$0x3]
    %v53 = vld [vmem:[%s1] sm:$0xff]
    %v54 = vld [vmem:[%s1 + $0x8] sm:$0xff]
    %v55 = vld [vmem:[#allocation5] sm:$0x1]
    %v57 = vlaneseq
    %v58 = vshrl.u32 %v57, 7
    %v59 = vsub.s32 0, %v58
    %v60 = vrot.slane %v55, %v59
    %vm62 = vcmask 130048
    %v64 = vsel %vm62, %v52, 0
    %66 = vmatprep.subr.mxu0 0.0
    %67 = vmatpush1.msra.mxu0 %v53
    %68 = vmatprep.subr.mxu0 0.0
    %69 = vmatpush1.msra.mxu0 %v54
    %70 = vmatprep.subr.mxu0 0.0
    %71 = vmatpush1.msra.mxu0 0.0
    %72 = vmatprep.subr.mxu0 0.0
    %73 = vmatpush1.msra.mxu0 0.0
    %74 = vmatprep.subr.mxu0 0.0
    %75 = vmatpush1.msra.mxu0 0.0
    %76 = vmatprep.subr.mxu0 0.0
    %77 = vmatpush1.msra.mxu0 0.0
    %78 = vmatprep.subr.mxu0 0.0
    %79 = vmatpush1.msra.mxu0 0.0
    %80 = vmatprep.subr.mxu0 0.0
    %81 = vmatpush1.msra.mxu0 0.0
    %82 = vmatprep.subr.mxu0 0.0
    %83 = vmatpush1.msra.mxu0 0.0
    %84 = vmatprep.subr.mxu0 0.0
    %85 = vmatpush1.msra.mxu0 0.0
    %86 = vmatprep.subr.mxu0 0.0
    %87 = vmatpush1.msra.mxu0 0.0
    %88 = vmatprep.subr.mxu0 0.0
    %89 = vmatpush1.msra.mxu0 0.0
    %90 = vmatprep.subr.mxu0 0.0
    %91 = vmatpush1.msra.mxu0 0.0
    %92 = vmatprep.subr.mxu0 0.0
    %93 = vmatpush1.msra.mxu0 0.0
    %94 = vmatprep.subr.mxu0 0.0
    %95 = vmatpush1.msra.mxu0 0.0
    %96 = vmatprep.subr.mxu0 0.0
    %97 = vmatpush1.msra.mxu0 0.0
    %98 = vmatprep.subr.mxu0 0.0
    %99 = vmatpush1.msra.mxu0 0.0
    %100 = vmatprep.subr.mxu0 0.0
    %101 = vmatpush1.msra.mxu0 0.0
    %102 = vmatprep.subr.mxu0 0.0
    %103 = vmatpush1.msra.mxu0 0.0
    %104 = vmatprep.subr.mxu0 0.0
    %105 = vmatpush1.msra.mxu0 0.0
    %106 = vmatprep.subr.mxu0 0.0
    %107 = vmatpush1.msra.mxu0 0.0
    %108 = vmatprep.subr.mxu0 0.0
    %109 = vmatpush1.msra.mxu0 0.0
    %110 = vmatprep.subr.mxu0 0.0
    %111 = vmatpush1.msra.mxu0 0.0
    %112 = vmatprep.subr.mxu0 0.0
    %113 = vmatpush1.msra.mxu0 0.0
    %114 = vmatprep.subr.mxu0 0.0
    %115 = vmatpush1.msra.mxu0 0.0
    %116 = vmatprep.subr.mxu0 0.0
    %117 = vmatpush1.msra.mxu0 0.0
    %118 = vmatprep.subr.mxu0 0.0
    %119 = vmatpush1.msra.mxu0 0.0
    %120 = vmatprep.subr.mxu0 0.0
    %121 = vmatpush1.msra.mxu0 0.0
    %122 = vmatprep.subr.mxu0 0.0
    %123 = vmatpush1.msra.mxu0 0.0
    %124 = vmatprep.subr.mxu0 0.0
    %125 = vmatpush1.msra.mxu0 0.0
    %126 = vmatprep.subr.mxu0 0.0
    %127 = vmatpush1.msra.mxu0 0.0
    %128 = vmatprep.subr.mxu0 0.0
    %129 = vmatpush1.msra.mxu0 0.0
    %130 = vmatprep.mubr.f32.mxu0 0.0
    %131 = vmatmul.mubr.f32.gmra.mrb[0].mxu0 %v64
    %v132 = vpop.f32.mrb[0].mxu0
    %v133 = vadd.f32 %v60, %v132
    %v134 = vpop.f32.mrb[0].mxu0
    %135 = vdwg.mxu0
    %v136 = vxor.u32 %v133, 2147483648
    %v137 = vmul.f32 %v136, 1.442695
    %v138 = vpow.pop %v137
    %v139 = vadd.f32 %v138, 1.0
    %v140 = vrcp.pop %v139
    %v141 = vmul.f32 1.0, %v140
    %v142 = vld [vmem:[%s3] sm:$0xff]
    %v143 = vld [vmem:[%s3 + $0x8] sm:$0xff]
    %v144 = vld [vmem:[%s3 + $0x10] sm:$0xff]
    %v145 = vld [vmem:[%s3 + $0x18] sm:$0xff]
    %v146 = vld [vmem:[%s4] sm:$0x1]
    %v148 = vlaneseq
    %v149 = vshrl.u32 %v148, 7
    %v150 = vsub.s32 0, %v149
    %v151 = vrot.slane %v146, %v150
    %vm153 = vcmask 261120
    %v155 = vsel %vm153, %v141, 0
    %157 = vmatprep.subr.mxu0 0.0
    %158 = vmatpush1.msra.mxu0 %v142
    %159 = vmatprep.subr.mxu0 0.0
    %160 = vmatpush1.msra.mxu0 %v143
    %161 = vmatprep.subr.mxu0 0.0
    %162 = vmatpush1.msra.mxu0 %v144
    %163 = vmatprep.subr.mxu0 0.0
    %164 = vmatpush1.msra.mxu0 %v145
    %165 = vmatprep.subr.mxu0 0.0
    %166 = vmatpush1.msra.mxu0 0.0
    %167 = vmatprep.subr.mxu0 0.0
    %168 = vmatpush1.msra.mxu0 0.0
    %169 = vmatprep.subr.mxu0 0.0
    %170 = vmatpush1.msra.mxu0 0.0
    %171 = vmatprep.subr.mxu0 0.0
    %172 = vmatpush1.msra.mxu0 0.0
    %173 = vmatprep.subr.mxu0 0.0
    %174 = vmatpush1.msra.mxu0 0.0
    %175 = vmatprep.subr.mxu0 0.0
    %176 = vmatpush1.msra.mxu0 0.0
    %177 = vmatprep.subr.mxu0 0.0
    %178 = vmatpush1.msra.mxu0 0.0
    %179 = vmatprep.subr.mxu0 0.0
    %180 = vmatpush1.msra.mxu0 0.0
    %181 = vmatprep.subr.mxu0 0.0
    %182 = vmatpush1.msra.mxu0 0.0
    %183 = vmatprep.subr.mxu0 0.0
    %184 = vmatpush1.msra.mxu0 0.0
    %185 = vmatprep.subr.mxu0 0.0
    %186 = vmatpush1.msra.mxu0 0.0
    %187 = vmatprep.subr.mxu0 0.0
    %188 = vmatpush1.msra.mxu0 0.0
    %189 = vmatprep.subr.mxu0 0.0
    %190 = vmatpush1.msra.mxu0 0.0
    %191 = vmatprep.subr.mxu0 0.0
    %192 = vmatpush1.msra.mxu0 0.0
    %193 = vmatprep.subr.mxu0 0.0
    %194 = vmatpush1.msra.mxu0 0.0
    %195 = vmatprep.subr.mxu0 0.0
    %196 = vmatpush1.msra.mxu0 0.0
    %197 = vmatprep.subr.mxu0 0.0
    %198 = vmatpush1.msra.mxu0 0.0
    %199 = vmatprep.subr.mxu0 0.0
    %200 = vmatpush1.msra.mxu0 0.0
    %201 = vmatprep.subr.mxu0 0.0
    %202 = vmatpush1.msra.mxu0 0.0
    %203 = vmatprep.subr.mxu0 0.0
    %204 = vmatpush1.msra.mxu0 0.0
    %205 = vmatprep.subr.mxu0 0.0
    %206 = vmatpush1.msra.mxu0 0.0
    %207 = vmatprep.subr.mxu0 0.0
    %208 = vmatpush1.msra.mxu0 0.0
    %209 = vmatprep.subr.mxu0 0.0
    %210 = vmatpush1.msra.mxu0 0.0
    %211 = vmatprep.subr.mxu0 0.0
    %212 = vmatpush1.msra.mxu0 0.0
    %213 = vmatprep.subr.mxu0 0.0
    %214 = vmatpush1.msra.mxu0 0.0
    %215 = vmatprep.subr.mxu0 0.0
    %216 = vmatpush1.msra.mxu0 0.0
    %217 = vmatprep.subr.mxu0 0.0
    %218 = vmatpush1.msra.mxu0 0.0
    %219 = vmatprep.subr.mxu0 0.0
    %220 = vmatpush1.msra.mxu0 0.0
    %221 = vmatprep.mubr.f32.mxu0 0.0
    %222 = vmatmul.mubr.f32.gmra.mrb[0].mxu0 %v155
    %v223 = vpop.f32.mrb[0].mxu0
    %v224 = vadd.f32 %v151, %v223
    %v225 = vpop.f32.mrb[0].mxu0
    %226 = vdwg.mxu0
    %v227 = vxor.u32 %v224, 2147483648
    %v228 = vmul.f32 %v227, 1.442695
    %v229 = vpow.pop %v228
    %v230 = vadd.f32 %v229, 1.0
    %v231 = vrcp.pop %v230
    %v232 = vmul.f32 1.0, %v231
    %v233 = vld [vmem:[%s5] sm:$0xff]
    %v234 = vld [vmem:[%s5 + $0x8] sm:$0xff]
    %v235 = vld [vmem:[%s5 + $0x10] sm:$0xff]
    %v236 = vld [vmem:[%s5 + $0x18] sm:$0xff]
    %v237 = vld [vmem:[#allocation2] sm:$0x1]
    %v239 = vlaneseq
    %v240 = vshrl.u32 %v239, 7
    %v241 = vsub.s32 0, %v240
    %v242 = vrot.slane %v237, %v241
    %v245 = vsel %vm153, %v232, 0
    %247 = vmatprep.subr.mxu0 0.0
    %248 = vmatpush1.msra.mxu0 %v233
    %249 = vmatprep.subr.mxu0 0.0
    %250 = vmatpush1.msra.mxu0 %v234
    %251 = vmatprep.subr.mxu0 0.0
    %252 = vmatpush1.msra.mxu0 %v235
    %253 = vmatprep.subr.mxu0 0.0
    %254 = vmatpush1.msra.mxu0 %v236
    %255 = vmatprep.subr.mxu0 0.0
    %256 = vmatpush1.msra.mxu0 0.0
    %257 = vmatprep.subr.mxu0 0.0
    %258 = vmatpush1.msra.mxu0 0.0
    %259 = vmatprep.subr.mxu0 0.0
    %260 = vmatpush1.msra.mxu0 0.0
    %261 = vmatprep.subr.mxu0 0.0
    %262 = vmatpush1.msra.mxu0 0.0
    %263 = vmatprep.subr.mxu0 0.0
    %264 = vmatpush1.msra.mxu0 0.0
    %265 = vmatprep.subr.mxu0 0.0
    %266 = vmatpush1.msra.mxu0 0.0
    %267 = vmatprep.subr.mxu0 0.0
    %268 = vmatpush1.msra.mxu0 0.0
    %269 = vmatprep.subr.mxu0 0.0
    %270 = vmatpush1.msra.mxu0 0.0
    %271 = vmatprep.subr.mxu0 0.0
    %272 = vmatpush1.msra.mxu0 0.0
    %273 = vmatprep.subr.mxu0 0.0
    %274 = vmatpush1.msra.mxu0 0.0
    %275 = vmatprep.subr.mxu0 0.0
    %276 = vmatpush1.msra.mxu0 0.0
    %277 = vmatprep.subr.mxu0 0.0
    %278 = vmatpush1.msra.mxu0 0.0
    %279 = vmatprep.subr.mxu0 0.0
    %280 = vmatpush1.msra.mxu0 0.0
    %281 = vmatprep.subr.mxu0 0.0
    %282 = vmatpush1.msra.mxu0 0.0
    %283 = vmatprep.subr.mxu0 0.0
    %284 = vmatpush1.msra.mxu0 0.0
    %285 = vmatprep.subr.mxu0 0.0
    %286 = vmatpush1.msra.mxu0 0.0
    %287 = vmatprep.subr.mxu0 0.0
    %288 = vmatpush1.msra.mxu0 0.0
    %289 = vmatprep.subr.mxu0 0.0
    %290 = vmatpush1.msra.mxu0 0.0
    %291 = vmatprep.subr.mxu0 0.0
    %292 = vmatpush1.msra.mxu0 0.0
    %293 = vmatprep.subr.mxu0 0.0
    %294 = vmatpush1.msra.mxu0 0.0
    %295 = vmatprep.subr.mxu0 0.0
    %296 = vmatpush1.msra.mxu0 0.0
    %297 = vmatprep.subr.mxu0 0.0
    %298 = vmatpush1.msra.mxu0 0.0
    %299 = vmatprep.subr.mxu0 0.0
    %300 = vmatpush1.msra.mxu0 0.0
    %301 = vmatprep.subr.mxu0 0.0
    %302 = vmatpush1.msra.mxu0 0.0
    %303 = vmatprep.subr.mxu0 0.0
    %304 = vmatpush1.msra.mxu0 0.0
    %305 = vmatprep.subr.mxu0 0.0
    %306 = vmatpush1.msra.mxu0 0.0
    %307 = vmatprep.subr.mxu0 0.0
    %308 = vmatpush1.msra.mxu0 0.0
    %309 = vmatprep.subr.mxu0 0.0
    %310 = vmatpush1.msra.mxu0 0.0
    %311 = vmatprep.mubr.f32.mxu0 0.0
    %312 = vmatmul.mubr.f32.gmra.mrb[0].mxu0 %v245
    %v313 = vpop.f32.mrb[0].mxu0
    %v314 = vadd.f32 %v242, %v313
    %v315 = vpop.f32.mrb[0].mxu0
    %316 = vdwg.mxu0
    %vm317 = vcmask 1024
    %318 = vst.msk [vmem:[%s7] sm:$0x3] %vm317, %v314
    // Predicated region
    $region38: #{tpu_custom_call.1} parent=1 // pred_check
      _
    $region39: #{tpu_custom_call.1} parent=1 // pred_check_branch
      %320 = sbr.rel (0) target = $region41
    $region40: #{tpu_custom_call.1} parent=1 // pred_region
      _
    $region41: #{tpu_custom_call.1} parent=1 // pred_fallthru
      _
    // Predicated region
    $region42: #{tpu_custom_call.1} parent=1 // pred_check
      _
    $region43: #{tpu_custom_call.1} parent=1 // pred_check_branch
      %322 = sbr.rel (0) target = $region45
    $region44: #{tpu_custom_call.1} parent=1 // pred_region
      _
    $region45: #{tpu_custom_call.1} parent=1 // pred_fallthru
      _
    %323 = vsyncpa [#allocation4], 1
    %324 = vsyncpa [#allocation6], 1

</llo_original>
